<compile_context>
chip_gen: v6e
topology: v6e:2x2x1
jax: 0.10.0
libtpu: 0.0.40
codegen_flags: <defaults>
</compile_context>

<pallas_src>
import functools

import jax
import jax.numpy as jnp
from jax.experimental import pallas as pl
from jax.experimental.pallas import tpu as pltpu

LN_EPS = 1e-5  # torch.nn.LayerNorm default


def _round_up(x: int, m: int) -> int:
    return ((x + m - 1) // m) * m


def _pick_tile_n(D: int, weight_budget_bytes: int = 16 * 1024 * 1024) -> int:
    """Largest output-column tile so the bf16 (D, tile_n) weight block stays under
    budget (keeps the working set friendly to v7x's 64 MiB VMEM per TensorCore)."""
    if D * D * 2 <= weight_budget_bytes:
        return D                       # weight fully resident in VMEM
    best = None
    t = 128
    while t < D:
        if D % t == 0 and D * t * 2 <= weight_budget_bytes:
            best = t
        t += 128
    return best if best is not None else D


def _make_kernel(n_tiled: bool):
    def _ln_relu(x, gamma, beta):
        mean = jnp.mean(x, axis=-1, keepdims=True)
        c = x - mean
        var = jnp.mean(c * c, axis=-1, keepdims=True)     # biased var, matches torch
        h = c * jax.lax.rsqrt(var + LN_EPS)
        h = h * gamma + beta
        return jnp.maximum(h, 0.0)

    if n_tiled:
        # Weight is N-tiled: w_ref is (D, tile_n); residual columns come from a
        # separate (tile_b, tile_n) view of x so no dynamic lane slicing is needed.
        def kernel(x_ref, xres_ref, gamma_ref, beta_ref, w_ref, b_ref, o_ref):
            x = x_ref[...].astype(jnp.float32)             # (tb, D) full row
            h = _ln_relu(x, gamma_ref[...], beta_ref[...])  # LN over the full D row
            y = jnp.dot(h.astype(jnp.bfloat16), w_ref[...],
                        preferred_element_type=jnp.float32)
            y = y + b_ref[...]
            o_ref[...] = (xres_ref[...].astype(jnp.float32) + y).astype(o_ref.dtype)
    else:
        def kernel(x_ref, gamma_ref, beta_ref, w_ref, b_ref, o_ref):
            x = x_ref[...].astype(jnp.float32)             # (tb, D)
            h = _ln_relu(x, gamma_ref[...], beta_ref[...])
            y = jnp.dot(h.astype(jnp.bfloat16), w_ref[...],
                        preferred_element_type=jnp.float32)
            y = y + b_ref[...]
            o_ref[...] = (x + y).astype(o_ref.dtype)
    return kernel


@functools.partial(jax.jit, static_argnames=("tile_b", "tile_n"))
def _residual_block_impl(x, gamma, beta, weight, bias, *, tile_b, tile_n):
    B, D = x.shape
    n_tiled = tile_n != D

    # Kernel-friendly parameter layouts. Under jit the transpose/cast is fused with
    # the call; for a hot path, pre-transpose/pre-cast the weight once outside.
    w_t = jnp.asarray(weight).T.astype(jnp.bfloat16)        # (D_in, D_out) bf16 MXU operand
    gamma2 = jnp.asarray(gamma).astype(jnp.float32).reshape(1, D)
    beta2 = jnp.asarray(beta).astype(jnp.float32).reshape(1, D)
    bias2 = jnp.asarray(bias).astype(jnp.float32).reshape(1, D)

    B_pad = _round_up(B, tile_b)
    x_p = jnp.pad(x, ((0, B_pad - B), (0, 0))) if B_pad != B else x

    grid = (B_pad // tile_b, D // tile_n)

    # Grid-invariant operands don't need double buffering (halves their VMEM).
    single = pl.Buffered(1)

    x_spec = pl.BlockSpec((tile_b, D), lambda i, j: (i, 0))
    gamma_spec = pl.BlockSpec((1, D), lambda i, j: (0, 0), pipeline_mode=single)
    beta_spec = pl.BlockSpec((1, D), lambda i, j: (0, 0), pipeline_mode=single)
    if n_tiled:
        # Weight / bias / residual-view move with j -> keep default double buffering.
        w_spec = pl.BlockSpec((D, tile_n), lambda i, j: (0, j))
        b_spec = pl.BlockSpec((1, tile_n), lambda i, j: (0, j))
        xres_spec = pl.BlockSpec((tile_b, tile_n), lambda i, j: (i, j))
        in_specs = [x_spec, xres_spec, gamma_spec, beta_spec, w_spec, b_spec]
        inputs = (x_p, x_p, gamma2, beta2, w_t, bias2)
    else:
        w_spec = pl.BlockSpec((D, D), lambda i, j: (0, 0), pipeline_mode=single)
        b_spec = pl.BlockSpec((1, D), lambda i, j: (0, 0), pipeline_mode=single)
        in_specs = [x_spec, gamma_spec, beta_spec, w_spec, b_spec]
        inputs = (x_p, gamma2, beta2, w_t, bias2)

    out_spec = pl.BlockSpec((tile_b, tile_n), lambda i, j: (i, j))

    # Rough VMEM working-set estimate; only raise the scoped limit when needed.
    xi = jnp.dtype(x.dtype).itemsize
    est = (D * tile_n * 2 * (2 if n_tiled else 1)            # weight block(s), bf16
           + 2 * tile_b * D * xi                              # x row tile (x2 buffers)
           + 2 * tile_b * tile_n * xi                         # out tile    (x2 buffers)
           + (2 * tile_b * tile_n * xi if n_tiled else 0)     # residual view
           + 4 * tile_b * D * 4                               # f32/bf16 temporaries
           + 16 * D * 4)
    vmem_limit = None
    if est > (16 << 20):   # above v5e's default scoped limit -> raise with headroom
        # _pick_tile_n keeps `est` small enough that this also fits v7x's 64 MiB/TC.
        vmem_limit = min(2 * est + (16 << 20), 100 << 20)

    out = pl.pallas_call(
        _make_kernel(n_tiled),
        out_shape=jax.ShapeDtypeStruct((B_pad, D), x.dtype),
        grid_spec=pltpu.PrefetchScalarGridSpec(
            num_scalar_prefetch=0,
            grid=grid,
            in_specs=in_specs,
            out_specs=out_spec,
        ),
        compiler_params=pltpu.CompilerParams(
            dimension_semantics=("parallel", "arbitrary"),
            vmem_limit_bytes=vmem_limit,
        ),
        # input/output aliasing of x intentionally NOT used: the wrapper is jit-ted
        # (x is an entry parameter -> aliasing would force an extra copy) and eager
        # callers may still hold x after the call.
    )(*inputs)

    return out[:B] if B_pad != B else out


def residual_block(x, gamma, beta, weight, bias, *, tile_b=256, tile_n=None):
    """out = x + Linear(relu(LayerNorm(x))).

    x: (B, D); weight: (D_out, D_in) == (D, D) torch convention; gamma/beta/bias: (D,).
    """
    B, D = x.shape
    assert weight.shape == (D, D), "residual requires dim_in == dim_out"
    if tile_n is None:
        tile_n = _pick_tile_n(D)
    assert D % tile_n == 0 and (tile_n == D or tile_n % 128 == 0), \
        "tile_n must divide D and be a multiple of 128 (or equal D)"
    # Row tile: clamp to the (8-aligned) batch and keep it a multiple of 8.
    tile_b = _round_up(min(tile_b, _round_up(B, 8)), 8)
    return _residual_block_impl(x, gamma, beta, weight, bias,
                                tile_b=tile_b, tile_n=tile_n)


def residual_block_ref(x, gamma, beta, weight, bias, *, mxu_bf16=False):
    """Pure-JAX reference mirroring the PyTorch forward (optionally mirroring the
    kernel's bf16 MXU operands)."""
    xf = x.astype(jnp.float32)
    mean = jnp.mean(xf, axis=-1, keepdims=True)
    var = jnp.mean((xf - mean) ** 2, axis=-1, keepdims=True)
    xn = (xf - mean) / jnp.sqrt(var + LN_EPS)
    h = jnp.maximum(xn * gamma + beta, 0.0)
    if mxu_bf16:
        y = jnp.dot(h.astype(jnp.bfloat16), weight.T.astype(jnp.bfloat16),
                    preferred_element_type=jnp.float32) + bias
    else:
        y = h @ weight.T + bias
    return (xf + y).astype(x.dtype)


if __name__ == "__main__":
    root = jax.random.PRNGKey(0)

    def run_case(B, D, **kwargs):
        kx, kw, kb = jax.random.split(jax.random.fold_in(root, B * 1000 + D), 3)
        x = jax.random.normal(kx, (B, D), dtype=jnp.float32)
        # nn.Linear-style uniform(-1/sqrt(D), 1/sqrt(D)) init; LN defaults gamma=1, beta=0.
        bound = 1.0 / (D ** 0.5)
        weight = jax.random.uniform(kw, (D, D), minval=-bound, maxval=bound,
                                    dtype=jnp.float32)      # (dim_out, dim_in)
        bias = jax.random.uniform(kb, (D,), minval=-bound, maxval=bound,
                                  dtype=jnp.float32)
        gamma = jnp.ones((D,), jnp.float32)
        beta = jnp.zeros((D,), jnp.float32)

        out = jax.block_until_ready(
            residual_block(x, gamma, beta, weight, bias, **kwargs))
        assert out.shape == (B, D)

        ref_bf16 = residual_block_ref(x, gamma, beta, weight, bias, mxu_bf16=True)
        ref_f32 = residual_block_ref(x, gamma, beta, weight, bias, mxu_bf16=False)
        assert jnp.allclose(out, ref_bf16, atol=5e-3, rtol=5e-3), \
            f"mismatch vs bf16-mirrored reference (B={B}, D={D})"
        assert jnp.allclose(out, ref_f32, atol=5e-2, rtol=5e-2), \
            f"mismatch vs f32 reference (B={B}, D={D})"

    run_case(16, 32)                 # resident-weight path, single grid step
    run_case(20, 32)                 # batch padded up to the row tile
    run_case(16, 256, tile_n=128)    # N-tiled weight path (forced small for the test)
    print("KERNEL_OK")
</pallas_src>

<mosaic_0001>
module attributes {stable_mosaic.version = 11 : i64} {
  func.func @kernel(%arg0: i32, %arg1: i32, %arg2: memref<16x32xf32, #tpu.memory_space<vmem>>, %arg3: memref<1x32xf32, #tpu.memory_space<vmem>>, %arg4: memref<1x32xf32, #tpu.memory_space<vmem>>, %arg5: memref<32x32xbf16, #tpu.memory_space<vmem>>, %arg6: memref<1x32xf32, #tpu.memory_space<vmem>>, %arg7: memref<16x32xf32, #tpu.memory_space<vmem>>) attributes {dimension_semantics = [#tpu.dimension_semantics<parallel>, #tpu.dimension_semantics<arbitrary>], iteration_bounds = array<i64: 1, 1>, scalar_prefetch = 0 : i64, scratch_operands = 0 : i64, tpu.core_type = #tpu.core_type<tc>, window_params = [{transform_indices = @transform_0, window_bounds = array<i64: 16, 32>}, {pipeline_mode = #tpu.pipeline_mode<synchronous>, transform_indices = @transform_1, window_bounds = array<i64: 1, 32>}, {pipeline_mode = #tpu.pipeline_mode<synchronous>, transform_indices = @transform_2, window_bounds = array<i64: 1, 32>}, {pipeline_mode = #tpu.pipeline_mode<synchronous>, transform_indices = @transform_3, window_bounds = array<i64: 32, 32>}, {pipeline_mode = #tpu.pipeline_mode<synchronous>, transform_indices = @transform_4, window_bounds = array<i64: 1, 32>}, {transform_indices = @transform_5, window_bounds = array<i64: 16, 32>}]} {
    %c0 = arith.constant 0 : index
    %c0_0 = arith.constant 0 : index
    %0 = vector.load %arg2[%c0, %c0_0] : memref<16x32xf32, #tpu.memory_space<vmem>>, vector<16x32xf32>
    %c0_1 = arith.constant 0 : index
    %c0_2 = arith.constant 0 : index
    %1 = vector.load %arg3[%c0_1, %c0_2] : memref<1x32xf32, #tpu.memory_space<vmem>>, vector<1x32xf32>
    %c0_3 = arith.constant 0 : index
    %c0_4 = arith.constant 0 : index
    %2 = vector.load %arg4[%c0_3, %c0_4] : memref<1x32xf32, #tpu.memory_space<vmem>>, vector<1x32xf32>
    %cst = arith.constant dense<0.000000e+00> : vector<16xf32>
    %3 = vector.multi_reduction <add>, %0, %cst [1] : vector<16x32xf32> to vector<16xf32>
    %4 = vector.shape_cast %3 : vector<16xf32> to vector<16x1xf32>
    %cst_5 = arith.constant 3.200000e+01 : f32
    %5 = vector.broadcast %cst_5 : f32 to vector<16x1xf32>
    %6 = arith.divf %4, %5 : vector<16x1xf32>
    %7 = vector.broadcast %6 : vector<16x1xf32> to vector<16x32xf32>
    %8 = arith.subf %0, %7 : vector<16x32xf32>
    %9 = arith.mulf %8, %8 : vector<16x32xf32>
    %cst_6 = arith.constant dense<0.000000e+00> : vector<16xf32>
    %10 = vector.multi_reduction <add>, %9, %cst_6 [1] : vector<16x32xf32> to vector<16xf32>
    %11 = vector.shape_cast %10 : vector<16xf32> to vector<16x1xf32>
    %cst_7 = arith.constant 3.200000e+01 : f32
    %12 = vector.broadcast %cst_7 : f32 to vector<16x1xf32>
    %13 = arith.divf %11, %12 : vector<16x1xf32>
    %cst_8 = arith.constant 9.99999974E-6 : f32
    %14 = vector.broadcast %cst_8 : f32 to vector<16x1xf32>
    %15 = arith.addf %13, %14 : vector<16x1xf32>
    %16 = math.rsqrt %15 : vector<16x1xf32>
    %17 = vector.broadcast %16 : vector<16x1xf32> to vector<16x32xf32>
    %18 = arith.mulf %8, %17 : vector<16x32xf32>
    %19 = vector.broadcast %1 : vector<1x32xf32> to vector<16x32xf32>
    %20 = arith.mulf %18, %19 : vector<16x32xf32>
    %21 = vector.broadcast %2 : vector<1x32xf32> to vector<16x32xf32>
    %22 = arith.addf %20, %21 : vector<16x32xf32>
    %cst_9 = arith.constant 0.000000e+00 : f32
    %23 = vector.broadcast %cst_9 : f32 to vector<16x32xf32>
    %24 = arith.maximumf %22, %23 : vector<16x32xf32>
    %25 = arith.truncf %24 : vector<16x32xf32> to vector<16x32xbf16>
    %c0_10 = arith.constant 0 : index
    %c0_11 = arith.constant 0 : index
    %26 = vector.load %arg5[%c0_10, %c0_11] : memref<32x32xbf16, #tpu.memory_space<vmem>>, vector<32x32xbf16>
    %cst_12 = arith.constant dense<0.000000e+00> : vector<16x32xf32>
    %27 = tpu.matmul %25, %26, %cst_12 {dimension_numbers = #tpu.dot_dimension_numbers<[1], [0], [0], [1], [0, 0, 1, 1], [], []>} : vector<16x32xbf16>, vector<32x32xbf16>, vector<16x32xf32> -> vector<16x32xf32>
    %c0_13 = arith.constant 0 : index
    %c0_14 = arith.constant 0 : index
    %28 = vector.load %arg6[%c0_13, %c0_14] : memref<1x32xf32, #tpu.memory_space<vmem>>, vector<1x32xf32>
    %29 = vector.broadcast %28 : vector<1x32xf32> to vector<16x32xf32>
    %30 = arith.addf %27, %29 : vector<16x32xf32>
    %31 = arith.addf %0, %30 : vector<16x32xf32>
    %c0_15 = arith.constant 0 : index
    %c0_16 = arith.constant 0 : index
    %32 = vector.load %arg7[%c0_15, %c0_16] : memref<16x32xf32, #tpu.memory_space<vmem>>, vector<16x32xf32>
    tpu.vector_store %arg7[%c0_15, %c0_16], %31 {strides = array<i32>} : memref<16x32xf32, #tpu.memory_space<vmem>>, vector<16x32xf32>,
    return
  }
  func.func @transform_0(%arg0: i32, %arg1: i32) -> (i32, i32) {
    %c0_i32 = arith.constant 0 : i32
    %c0_i32_0 = arith.constant 0 : i32
    return %arg0, %c0_i32 : i32, i32
  }
  func.func @transform_1(%arg0: i32, %arg1: i32) -> (i32, i32) {
    %c0_i32 = arith.constant 0 : i32
    %c0_i32_0 = arith.constant 0 : i32
    %c0_i32_1 = arith.constant 0 : i32
    return %c0_i32, %c0_i32_0 : i32, i32
  }
  func.func @transform_2(%arg0: i32, %arg1: i32) -> (i32, i32) {
    %c0_i32 = arith.constant 0 : i32
    %c0_i32_0 = arith.constant 0 : i32
    %c0_i32_1 = arith.constant 0 : i32
    return %c0_i32, %c0_i32_0 : i32, i32
  }
  func.func @transform_3(%arg0: i32, %arg1: i32) -> (i32, i32) {
    %c0_i32 = arith.constant 0 : i32
    %c0_i32_0 = arith.constant 0 : i32
    %c0_i32_1 = arith.constant 0 : i32
    return %c0_i32, %c0_i32_0 : i32, i32
  }
  func.func @transform_4(%arg0: i32, %arg1: i32) -> (i32, i32) {
    %c0_i32 = arith.constant 0 : i32
    %c0_i32_0 = arith.constant 0 : i32
    %c0_i32_1 = arith.constant 0 : i32
    return %c0_i32, %c0_i32_0 : i32, i32
  }
  func.func @transform_5(%arg0: i32, %arg1: i32) -> (i32, i32) {
    %c0_i32 = arith.constant 0 : i32
    return %arg0, %arg1 : i32, i32
  }
}

</mosaic_0001>

<llo_original>
// kernel: _residual_block_impl.1
$region0: #{_residual_block_impl.1}
  #allocation0 [shape = 'u32[]', space=smem, size = 0x4, offset = 0x4, fixed_abs, tag = 'smem constant byte address 0x4 - core index']
  #allocation1 [shape = 'u32[144,128]{1,0:T(1,128)}', space=vmem, size = 0x12000, scoped, tag = 'internal scratch']
  %s0 = inlined_call_operand.vmem [shape: f32[16,32], index: 0, kind: input, shape index: {}]
  %s1 = inlined_call_operand.vmem [shape: f32[1,32], index: 1, kind: input, shape index: {}]
  %s2 = inlined_call_operand.vmem [shape: f32[1,32], index: 2, kind: input, shape index: {}]
  %s3 = inlined_call_operand.vmem [shape: bf16[32,32], index: 3, kind: input, shape index: {}]
  %s4 = inlined_call_operand.vmem [shape: f32[1,32], index: 4, kind: input, shape index: {}]
  %s5 = inlined_call_operand.hbm [shape: f32[16,32], index: 5, kind: output, shape index: {}]
  %s6 = sld [smem:[#allocation0]]
  $region30: #{_residual_block_impl.1} parent=0
    _
  %s8 = ssub.s32 1, %s6
  %s9 = scalar_select 0, %s8, %s6
  $region1: #{_residual_block_impl.1} parent=0
    #allocation2 [shape = 'u8[8192]{0}', space=vmem, size = 0x2000, scoped, tag = 'output window, operand 0, single buffered']
    #allocation3 [shape = 's32[1]{0}', space=sflag, size = 0x4, scoped, tag = 'scoped memory for _residual_block_impl.1']
    %10 = vsyncpa [#allocation3], 0
    // Predicated region
    $region2: #{_residual_block_impl.1} parent=1 // pred_check
      _
    $region3: #{_residual_block_impl.1} parent=1 // pred_check_branch
      %12 = sbr.rel (0) target = $region5
    $region4: #{_residual_block_impl.1} parent=1 // pred_region
      _
    $region5: #{_residual_block_impl.1} parent=1 // pred_fallthru
      _
    // Predicated region
    $region6: #{_residual_block_impl.1} parent=1 // pred_check
      _
    $region7: #{_residual_block_impl.1} parent=1 // pred_check_branch
      %14 = sbr.rel (0) target = $region9
    $region8: #{_residual_block_impl.1} parent=1 // pred_region
      _
    $region9: #{_residual_block_impl.1} parent=1 // pred_fallthru
      _
    // Predicated region
    $region10: #{_residual_block_impl.1} parent=1 // pred_check
      _
    $region11: #{_residual_block_impl.1} parent=1 // pred_check_branch
      %16 = sbr.rel (0) target = $region13
    $region12: #{_residual_block_impl.1} parent=1 // pred_region
      _
    $region13: #{_residual_block_impl.1} parent=1 // pred_fallthru
      _
    // Predicated region
    $region14: #{_residual_block_impl.1} parent=1 // pred_check
      _
    $region15: #{_residual_block_impl.1} parent=1 // pred_check_branch
      %18 = sbr.rel (0) target = $region17
    $region16: #{_residual_block_impl.1} parent=1 // pred_region
      _
    $region17: #{_residual_block_impl.1} parent=1 // pred_fallthru
      _
    // Predicated region
    $region18: #{_residual_block_impl.1} parent=1 // pred_check
      _
    $region19: #{_residual_block_impl.1} parent=1 // pred_check_branch
      %20 = sbr.rel (0) target = $region21
    $region20: #{_residual_block_impl.1} parent=1 // pred_region
      _
    $region21: #{_residual_block_impl.1} parent=1 // pred_fallthru
      _
    %v22 = vld [vmem:[%s0] sm:$0xff]
    %v23 = vld [vmem:[%s0 + $0x8] sm:$0xff]
    %v24 = vld [vmem:[%s1] sm:$0x1]
    %v25 = vld [vmem:[%s2] sm:$0x1]
    %vm26 = vcmask 261120
    %v27 = vsel %vm26, %v22, 0.0
    %28 = vadd.xlane.f32.xlu0 %v27
    %v29 = vpop.xlane.xlu0 %28
    %v30 = vsel %vm26, %v23, 0.0
    %31 = vadd.xlane.f32.xlu0 %v30
    %v32 = vpop.xlane.xlu0 %31
    %v33 = vrcp.pop 32.0
    %v34 = vmul.f32 %v29, %v33
    %v35 = vmul.f32 %v32, %v33
    %v36 = vsub.f32 %v22, %v34
    %v37 = vsub.f32 %v23, %v35
    %v38 = vmul.f32 %v36, %v36
    %v39 = vmul.f32 %v37, %v37
    %v40 = vsel %vm26, %v38, 0.0
    %41 = vadd.xlane.f32.xlu0 %v40
    %v42 = vpop.xlane.xlu0 %41
    %v43 = vsel %vm26, %v39, 0.0
    %44 = vadd.xlane.f32.xlu0 %v43
    %v45 = vpop.xlane.xlu0 %44
    %v46 = vmul.f32 %v42, %v33
    %v47 = vmul.f32 %v45, %v33
    %v48 = vadd.f32 %v46, 1e-05
    %v49 = vadd.f32 %v47, 1e-05
    %v50 = vrsqrt.pop %v48
    %v51 = vrsqrt.pop %v49
    %v52 = vmul.f32 %v36, %v50
    %v53 = vmul.f32 %v37, %v51
    %v55 = vlaneseq
    %v56 = vshrl.u32 %v55, 7
    %v57 = vsub.s32 0, %v56
    %v58 = vrot.slane %v24, %v57
    %v60 = vmul.f32 %v52, %v58
    %v61 = vmul.f32 %v53, %v58
    %v63 = vlaneseq
    %v64 = vshrl.u32 %v63, 7
    %v65 = vsub.s32 0, %v64
    %v66 = vrot.slane %v25, %v65
    %v68 = vadd.f32 %v60, %v66
    %v69 = vadd.f32 %v61, %v66
    %v70 = vmax.f32 %v68, 0.0
    %v71 = vmax.f32 %v69, 0.0
    %v72 = vpack.c.bf16 %v71, %v70
    %v73 = vld [vmem:[%s3] sm:$0xf]
    %v74 = vld [vmem:[%s3 + $0x4] sm:$0xf]
    %v75 = vld [vmem:[%s3 + $0x8] sm:$0xf]
    %v76 = vld [vmem:[%s3 + $0xc] sm:$0xf]
    %v77 = vld [vmem:[%s4] sm:$0x1]
    %v79 = vlaneseq
    %v80 = vshrl.u32 %v79, 7
    %v81 = vsub.s32 0, %v80
    %v82 = vrot.slane %v77, %v81
    %v88 = vunpack.c.l.b16 %v73
    %v89 = vunpack.c.l.b16 %v74
    %v90 = vunpack.c.l.b16 %v75
    %v91 = vunpack.c.l.b16 %v76
    %v92 = vpack.c.b16 %v89, %v88
    %v93 = vpack.c.b16 %v91, %v90
    %v97 = vsel %vm26, %v72, 0
    %99 = vmatprep.subr.bf16.mxu0 0
    %100 = vmatpush1.bf16.msra.mxu0 0
    %101 = vmatprep.subr.bf16.mxu0 0
    %102 = vmatpush1.bf16.msra.mxu0 0
    %103 = vmatprep.subr.bf16.mxu0 0
    %104 = vmatpush1.bf16.msra.mxu0 0
    %105 = vmatprep.subr.bf16.mxu0 0
    %106 = vmatpush1.bf16.msra.mxu0 0
    %107 = vmatprep.subr.bf16.mxu0 0
    %108 = vmatpush1.bf16.msra.mxu0 0
    %109 = vmatprep.subr.bf16.mxu0 0
    %110 = vmatpush1.bf16.msra.mxu0 0
    %111 = vmatprep.subr.bf16.mxu0 0
    %112 = vmatpush1.bf16.msra.mxu0 %v93
    %113 = vmatprep.subr.bf16.mxu0 0
    %114 = vmatpush1.bf16.msra.mxu0 %v92
    %115 = vmatprep.subr.bf16.mxu0 0
    %116 = vmatpush2.bf16.msra.mxu0 0
    %117 = vmatprep.subr.bf16.mxu0 0
    %118 = vmatpush2.bf16.msra.mxu0 0
    %119 = vmatprep.subr.bf16.mxu0 0
    %120 = vmatpush2.bf16.msra.mxu0 0
    %121 = vmatprep.subr.bf16.mxu0 0
    %122 = vmatpush2.bf16.msra.mxu0 0
    %123 = vmatprep.subr.bf16.mxu0 0
    %124 = vmatpush2.bf16.msra.mxu0 0
    %125 = vmatprep.subr.bf16.mxu0 0
    %126 = vmatpush2.bf16.msra.mxu0 0
    %127 = vmatprep.subr.bf16.mxu0 0
    %128 = vmatpush2.bf16.msra.mxu0 0
    %129 = vmatprep.subr.bf16.mxu0 0
    %130 = vmatpush2.bf16.msra.mxu0 0
    %131 = vmatprep.mubr.bf16.mxu0 0
    %132 = vmatmul.mubr.bf16.gmra.mxu0 %v97
    %v133 = vpop.f32.mrf.mxu0
    %v134 = vadd.f32 %v82, %v133
    %v135 = vpop.f32.mrf.mxu0
    %v136 = vpop.f32.mrf.mxu0
    %v137 = vadd.f32 %v82, %v136
    %v138 = vpop.f32.mrf.mxu0
    %139 = vdwg.mxu0
    %v140 = vadd.f32 %v22, %v134
    %v141 = vadd.f32 %v23, %v137
    %142 = vst.msk [vmem:[#allocation2] sm:$0xff] %vm26, %v140
    %143 = vst.msk [vmem:[#allocation2 + $0x8] sm:$0xff] %vm26, %v141
    // Predicated region
    $region22: #{_residual_block_impl.1} parent=1 // pred_check
      _
    $region23: #{_residual_block_impl.1} parent=1 // pred_check_branch
      %145 = sbr.rel (0) target = $region25
    $region24: #{_residual_block_impl.1} parent=1 // pred_region
      %s147 = ssub.s32 256, 256
      %148 = vsyncadd [#allocation3], %s147
      %s149 = sshll.u32 [#allocation2], 4
      %s150 = int_to_ptr.vmem [resolvable:$true] %s149
      %155 = dma.vmem_to_hbm [thread:$0]  %s150, 256, %s5, [#allocation3], 128, 128, 8
    $region25: #{_residual_block_impl.1} parent=1 // pred_fallthru
      _
    // Predicated region
    $region26: #{_residual_block_impl.1} parent=1 // pred_check
      _
    $region27: #{_residual_block_impl.1} parent=1 // pred_check_branch
      %157 = sbr.rel (0) target = $region29
    $region28: #{_residual_block_impl.1} parent=1 // pred_region
      %158 = dma.done [#allocation3], 256
    $region29: #{_residual_block_impl.1} parent=1 // pred_fallthru
      _
    %159 = vsyncpa [#allocation3], 1

</llo_original>
